<compile_context>
chip_gen: v7x
topology: tpu7x:2x2x1
jax: 0.10.0
libtpu: 0.0.40
codegen_flags: <defaults>
</compile_context>

<pallas_src>
import jax
import jax.numpy as jnp
from jax import lax
from jax.experimental import pallas as pl
from jax.experimental.pallas import tpu as pltpu


def _round_up(a: int, b: int) -> int:
    return (a + b - 1) // b * b


def _sublane_pack(dtype) -> int:
    # Rows per vreg sublane group for the given element width.
    return {4: 8, 2: 16, 1: 32}.get(jnp.dtype(dtype).itemsize, 8)


def tied_scorer_kernel(x_ref, w_ref, b_ref, o_ref, acc_ref):
    # x_ref  : (tm, tk)  row tile of the flattened activations
    # w_ref  : (tn, tk)  vocab tile of the embedding weight (native (V, D))
    # b_ref  : (1, tn)   vocab tile of the bias
    # o_ref  : (tm, tn)  output tile
    # acc_ref: (tm, tn)  f32 accumulator scratch (reduction over D tiles)
    k = pl.program_id(2)

    @pl.when(k == 0)
    def _():
        acc_ref[...] = jnp.zeros_like(acc_ref)

    x = x_ref[...]
    w = w_ref[...]
    if w.dtype != x.dtype:  # static branch; mixed-dtype call falls back to a VPU cast
        w = w.astype(x.dtype)

    acc_ref[...] += lax.dot_general(
        x, w,
        dimension_numbers=(((1,), (1,)), ((), ())),  # x @ w.T, MXU-native (no transpose)
        preferred_element_type=jnp.float32,
    )

    @pl.when(k == pl.num_programs(2) - 1)
    def _():
        o_ref[...] = (acc_ref[...] + b_ref[...].astype(jnp.float32)).astype(o_ref.dtype)


# Cache: does pipeline_mode=pl.Buffered(n) lower on this runtime?
_BUFFERED_SUPPORT = {}


def tied_scorer(
    to_score,
    emb_weight,
    bias,
    *,
    tm: int | None = None,
    tn: int = 512,
    tk: int | None = None,
    out_dtype=None,
    weight_buffers: int = 3,
    vmem_limit_bytes: int | None = None,
):
    """to_score: (..., D); emb_weight: (V, D); bias: (V,) -> (..., V).

    Pass emb_weight pre-cast (e.g. bf16) at parameter-init time: no per-call
    cast/pad/slice happens here.
    """
    *lead, D = to_score.shape
    V, D2 = emb_weight.shape
    assert D2 == D, "embedding dim mismatch"
    assert bias.shape == (V,), "bias shape mismatch"

    M = 1
    for s in lead:
        M *= int(s)

    x2d = to_score.reshape(M, D)
    b2d = bias.reshape(1, V)
    out_dtype = jnp.dtype(out_dtype) if out_dtype is not None else x2d.dtype

    x_item = x2d.dtype.itemsize
    w_item = emb_weight.dtype.itemsize
    o_item = jnp.dtype(out_dtype).itemsize

    # --- VMEM budget per generation (v7x: 64 MiB/TC; v5e/v6e: 128 MiB) ------
    if vmem_limit_bytes is None:
        try:
            cap = pltpu.get_tpu_info().vmem_capacity_bytes
        except Exception:
            cap = 64 * 1024 * 1024
        vmem_limit_bytes = min(int(0.65 * cap), 96 * 1024 * 1024)
    budget = int(0.80 * vmem_limit_bytes)  # headroom for Mosaic internal scratch

    # --- Tile selection ------------------------------------------------------
    pack = _sublane_pack(x2d.dtype)
    if tm is None:
        tm = 1024 if M >= 4096 else 512  # bigger row tile => less weight re-streaming
    tm_eff = _round_up(min(tm, _round_up(M, pack)), 8)
    tn_eff = min(tn, _round_up(V, 128))

    nbuf_w = max(2, int(weight_buffers or 2))

    def _fits(tm_, tk_):
        x_b = 2 * tm_ * tk_ * x_item                 # double-buffered activation tile
        w_b = nbuf_w * tn_eff * tk_ * w_item         # (deeply) buffered weight tile
        b_b = 2 * tn_eff * bias.dtype.itemsize
        o_b = 2 * tm_ * tn_eff * o_item              # double-buffered output tile
        a_b = tm_ * tn_eff * 4                       # f32 accumulator scratch
        return x_b + w_b + b_b + o_b + a_b <= budget

    if tk is not None:
        # A user-provided D tile must divide D (and be lane-aligned) or we fall
        # back to the full-D block to keep the reduction exact without masking.
        good = tk >= D or (D % tk == 0 and tk % 128 == 0)
        tk_candidates = [min(tk, D) if good else D]
    else:
        tk_candidates = [D] + [c for c in (2048, 1024, 512, 256, 128)
                               if c < D and D % c == 0]

    tk_eff = None
    tm_cur = tm_eff
    while tk_eff is None:
        for c in tk_candidates:
            cc = min(c, D)
            if _fits(tm_cur, cc):
                tk_eff = cc
                break
        if tk_eff is None:
            if tm_cur <= pack:
                tk_eff = min(tk_candidates[-1], D)  # best effort
                break
            tm_cur = max(pack, _round_up(tm_cur // 2, 8))
    tm_eff = tm_cur

    grid_m = pl.cdiv(M, tm_eff)
    grid_n = pl.cdiv(V, tn_eff)
    grid_k = 1 if tk_eff >= D else D // tk_eff
    grid = (grid_m, grid_n, grid_k)

    # Advisory cost: include the weight re-stream factor (once per row tile)
    # and the activation re-stream when D is tiled.
    cost = pl.CostEstimate(
        flops=2 * M * V * D,
        transcendentals=0,
        bytes_accessed=(
            M * D * x_item * (grid_n if grid_k > 1 else 1)
            + V * D * w_item * grid_m
            + V * bias.dtype.itemsize * grid_m
            + M * V * o_item
        ),
    )

    def _call(weight_pipeline_mode):
        w_kwargs = {}
        if weight_pipeline_mode is not None:
            w_kwargs["pipeline_mode"] = weight_pipeline_mode
        return pl.pallas_call(
            tied_scorer_kernel,
            out_shape=jax.ShapeDtypeStruct((M, V), out_dtype),
            grid_spec=pltpu.PrefetchScalarGridSpec(
                num_scalar_prefetch=0,
                grid=grid,
                in_specs=[
                    # activations: row tile, re-used across the vocab axis
                    pl.BlockSpec((tm_eff, tk_eff), lambda i, j, k: (i, k)),
                    # weight: vocab tile in native (V, D) layout (streamed operand)
                    pl.BlockSpec((tn_eff, tk_eff), lambda i, j, k: (j, k), **w_kwargs),
                    # bias: vocab tile
                    pl.BlockSpec((1, tn_eff), lambda i, j, k: (0, j)),
                ],
                out_specs=pl.BlockSpec((tm_eff, tn_eff), lambda i, j, k: (i, j)),
                scratch_shapes=[pltpu.VMEM((tm_eff, tn_eff), jnp.float32)],
            ),
            compiler_params=pltpu.CompilerParams(
                dimension_semantics=("parallel", "parallel", "arbitrary"),
                vmem_limit_bytes=vmem_limit_bytes,
            ),
            cost_estimate=cost,
        )(x2d, emb_weight, b2d)

    use_buffered = nbuf_w != 2 and hasattr(pl, "Buffered")
    if use_buffered and _BUFFERED_SUPPORT.get(nbuf_w) is False:
        use_buffered = False

    if use_buffered and _BUFFERED_SUPPORT.get(nbuf_w):
        out = _call(pl.Buffered(nbuf_w))
    elif use_buffered:
        try:
            out = jax.block_until_ready(_call(pl.Buffered(nbuf_w)))
            _BUFFERED_SUPPORT[nbuf_w] = True
        except Exception:
            _BUFFERED_SUPPORT[nbuf_w] = False
            out = _call(None)
    else:
        out = _call(None)

    return out.reshape(*lead, V)


if __name__ == "__main__":
    key = jax.random.PRNGKey(0)
    k_x, k_w, k_b, k_x2, k_w2, k_b2 = jax.random.split(key, 6)

    # --- Test 1: small shapes consistent with the module's forward ----------
    #   to_score: (batch=2, seq=8, hidden=32), vocab_size=256
    B, S, D, V = 2, 8, 32, 256
    to_score = jax.random.normal(k_x, (B, S, D), dtype=jnp.float32)
    emb_weight = jax.random.normal(k_w, (V, D), dtype=jnp.float32)  # nn.Embedding ~ N(0,1)
    bias = jax.random.uniform(k_b, (V,), dtype=jnp.float32, minval=-0.1, maxval=0.1)

    # f32 path.  (The MXU may run f32 matmuls via bf16 passes at default
    # precision, so compare with a bandwidth-appropriate tolerance.)
    out = jax.block_until_ready(tied_scorer(to_score, emb_weight, bias))
    ref = jnp.matmul(to_score, emb_weight.T) + bias
    assert out.shape == (B, S, V)
    assert jnp.allclose(out, ref, atol=2.5e-1, rtol=2.5e-2), "f32 path mismatch"

    # bf16 weight-streaming path (recommended default): weight is pre-cast
    # ONCE at "init time" (not per call), activations bf16, f32 MXU
    # accumulation, f32 logits requested explicitly for the tight check.
    w_bf16 = emb_weight.astype(jnp.bfloat16)   # init-time cast, not in the hot path
    x_bf16 = to_score.astype(jnp.bfloat16)
    out_bf = jax.block_until_ready(
        tied_scorer(x_bf16, w_bf16, bias, out_dtype=jnp.float32)
    )
    ref_bf = jnp.matmul(x_bf16.astype(jnp.float32), w_bf16.astype(jnp.float32).T) + bias
    assert out_bf.shape == (B, S, V)
    assert jnp.allclose(out_bf, ref_bf, atol=2e-2, rtol=2e-2), "bf16 path mismatch"

    # bf16 logits (default out_dtype follows the activations) — halves the
    # largest HBM write for big V.
    out_bf16_logits = jax.block_until_ready(tied_scorer(x_bf16, w_bf16, bias))
    assert out_bf16_logits.dtype == jnp.bfloat16
    assert jnp.allclose(out_bf16_logits.astype(jnp.float32), ref_bf,
                        atol=1e-1, rtol=5e-2), "bf16-logits path mismatch"

    # --- Test 2: ragged M / V (no padding; Pallas masks the edge blocks) ----
    B2, S2, D2, V2 = 3, 5, 32, 300
    x2 = jax.random.normal(k_x2, (B2, S2, D2), dtype=jnp.float32)
    w2 = jax.random.normal(k_w2, (V2, D2), dtype=jnp.float32)
    b2 = jax.random.uniform(k_b2, (V2,), dtype=jnp.float32, minval=-0.1, maxval=0.1)

    out2 = jax.block_until_ready(tied_scorer(x2, w2, b2))
    ref2 = jnp.matmul(x2, w2.T) + b2
    assert out2.shape == (B2, S2, V2)
    assert jnp.allclose(out2, ref2, atol=2.5e-1, rtol=2.5e-2), "ragged-edge mismatch"

    print("KERNEL_OK")
</pallas_src>

<mosaic_0001>
module attributes {stable_mosaic.version = 11 : i64} {
  func.func @tied_scorer_kernel(%arg0: i32, %arg1: i32, %arg2: i32, %arg3: memref<16x32xf32, #tpu.memory_space<vmem>>, %arg4: memref<256x32xf32, #tpu.memory_space<vmem>>, %arg5: memref<1x256xf32, #tpu.memory_space<vmem>>, %arg6: memref<16x256xf32, #tpu.memory_space<vmem>>, %arg7: memref<16x256xf32, #tpu.memory_space<vmem>>) attributes {dimension_semantics = [#tpu.dimension_semantics<parallel>, #tpu.dimension_semantics<parallel>, #tpu.dimension_semantics<arbitrary>], iteration_bounds = array<i64: 1, 1, 1>, scalar_prefetch = 0 : i64, scratch_operands = 1 : i64, tpu.core_type = #tpu.core_type<tc>, window_params = [{transform_indices = @transform_0, window_bounds = array<i64: 16, 32>}, {transform_indices = @transform_1, window_bounds = array<i64: 256, 32>}, {transform_indices = @transform_2, window_bounds = array<i64: 1, 256>}, {transform_indices = @transform_3, window_bounds = array<i64: 16, 256>}]} {
    %c0_i32 = arith.constant 0 : i32
    %0 = arith.cmpi eq, %arg2, %c0_i32 : i32
    %1 = arith.extui %0 : i1 to i32
    %c0_i32_0 = arith.constant 0 : i32
    %2 = arith.cmpi ne, %1, %c0_i32_0 : i32
    scf.if %2 {
      %cst_10 = arith.constant 0.000000e+00 : f32
      %12 = vector.broadcast %cst_10 : f32 to vector<16x256xf32>
      %c0_11 = arith.constant 0 : index
      %c0_12 = arith.constant 0 : index
      %13 = vector.load %arg7[%c0_11, %c0_12] : memref<16x256xf32, #tpu.memory_space<vmem>>, vector<16x256xf32>
      tpu.vector_store %arg7[%c0_11, %c0_12], %12 {strides = array<i32>} : memref<16x256xf32, #tpu.memory_space<vmem>>, vector<16x256xf32>,
    } else {
    }
    %c0 = arith.constant 0 : index
    %c0_1 = arith.constant 0 : index
    %3 = vector.load %arg3[%c0, %c0_1] : memref<16x32xf32, #tpu.memory_space<vmem>>, vector<16x32xf32>
    %c0_2 = arith.constant 0 : index
    %c0_3 = arith.constant 0 : index
    %4 = vector.load %arg4[%c0_2, %c0_3] : memref<256x32xf32, #tpu.memory_space<vmem>>, vector<256x32xf32>
    %c0_4 = arith.constant 0 : index
    %c0_5 = arith.constant 0 : index
    %5 = vector.load %arg7[%c0_4, %c0_5] : memref<16x256xf32, #tpu.memory_space<vmem>>, vector<16x256xf32>
    %cst = arith.constant dense<0.000000e+00> : vector<16x256xf32>
    %6 = tpu.matmul %3, %4, %cst {dimension_numbers = #tpu.dot_dimension_numbers<[1], [1], [0], [0], [0, 0, 1, 0], [], []>} : vector<16x32xf32>, vector<256x32xf32>, vector<16x256xf32> -> vector<16x256xf32>
    %7 = arith.addf %5, %6 : vector<16x256xf32>
    %c0_6 = arith.constant 0 : index
    %c0_7 = arith.constant 0 : index
    %8 = vector.load %arg7[%c0_6, %c0_7] : memref<16x256xf32, #tpu.memory_space<vmem>>, vector<16x256xf32>
    tpu.vector_store %arg7[%c0_6, %c0_7], %7 {strides = array<i32>} : memref<16x256xf32, #tpu.memory_space<vmem>>, vector<16x256xf32>,
    %c0_i32_8 = arith.constant 0 : i32
    %9 = arith.cmpi eq, %arg2, %c0_i32_8 : i32
    %10 = arith.extui %9 : i1 to i32
    %c0_i32_9 = arith.constant 0 : i32
    %11 = arith.cmpi ne, %10, %c0_i32_9 : i32
    scf.if %11 {
      %c0_10 = arith.constant 0 : index
      %c0_11 = arith.constant 0 : index
      %12 = vector.load %arg7[%c0_10, %c0_11] : memref<16x256xf32, #tpu.memory_space<vmem>>, vector<16x256xf32>
      %c0_12 = arith.constant 0 : index
      %c0_13 = arith.constant 0 : index
      %13 = vector.load %arg5[%c0_12, %c0_13] : memref<1x256xf32, #tpu.memory_space<vmem>>, vector<1x256xf32>
      %14 = vector.broadcast %13 : vector<1x256xf32> to vector<16x256xf32>
      %15 = arith.addf %12, %14 : vector<16x256xf32>
      %c0_14 = arith.constant 0 : index
      %c0_15 = arith.constant 0 : index
      %16 = vector.load %arg6[%c0_14, %c0_15] : memref<16x256xf32, #tpu.memory_space<vmem>>, vector<16x256xf32>
      tpu.vector_store %arg6[%c0_14, %c0_15], %15 {strides = array<i32>} : memref<16x256xf32, #tpu.memory_space<vmem>>, vector<16x256xf32>,
    } else {
    }
    return
  }
  func.func @transform_0(%arg0: i32, %arg1: i32, %arg2: i32) -> (i32, i32) {
    %c0_i32 = arith.constant 0 : i32
    return %arg0, %arg2 : i32, i32
  }
  func.func @transform_1(%arg0: i32, %arg1: i32, %arg2: i32) -> (i32, i32) {
    %c0_i32 = arith.constant 0 : i32
    return %arg1, %arg2 : i32, i32
  }
  func.func @transform_2(%arg0: i32, %arg1: i32, %arg2: i32) -> (i32, i32) {
    %c0_i32 = arith.constant 0 : i32
    %c0_i32_0 = arith.constant 0 : i32
    return %c0_i32, %arg1 : i32, i32
  }
  func.func @transform_3(%arg0: i32, %arg1: i32, %arg2: i32) -> (i32, i32) {
    %c0_i32 = arith.constant 0 : i32
    return %arg0, %arg1 : i32, i32
  }
}

</mosaic_0001>

<llo_original>
// kernel: tpu_custom_call.1
$region0: #{tpu_custom_call.1}
  #allocation0 [shape = 'u32[]', space=smem, size = 0x4, offset = 0x4, fixed_abs, tag = 'smem constant byte address 0x4 - core index']
  #allocation1 [shape = 'u32[144,128]{1,0:T(1,128)}', space=vmem, size = 0x12000, scoped, tag = 'internal scratch']
  #allocation2 [shape = 'f32[16,256]{1,0:T(8,128)}', space=vmem, size = 0x4000, scoped, tag = 'scratch operand']
  %s0 = inlined_call_operand.vmem [shape: f32[16,32], index: 0, kind: input, shape index: {}]
  %s1 = inlined_call_operand.vmem [shape: f32[256,32], index: 1, kind: input, shape index: {}]
  %s2 = inlined_call_operand.vmem [shape: f32[1,256], index: 2, kind: input, shape index: {}]
  %s3 = inlined_call_operand.hbm [shape: f32[16,256], index: 3, kind: output, shape index: {}]
  %s4 = sld [smem:[#allocation0]]
  $region30: #{tpu_custom_call.1} parent=0
    _
  %s6 = ssub.s32 1, %s4
  %s7 = scalar_select 0, %s6, %s4
  $region1: #{tpu_custom_call.1} parent=0
    #allocation3 [shape = 'u8[16384]{0}', space=vmem, size = 0x4000, scoped, tag = 'output window, operand 0, single buffered']
    #allocation4 [shape = 's32[1]{0}', space=sflag, size = 0x4, scoped, tag = 'scoped memory for tpu_custom_call.1']
    %8 = vsyncpa [#allocation4], 0
    // Predicated region
    $region2: #{tpu_custom_call.1} parent=1 // pred_check
      _
    $region3: #{tpu_custom_call.1} parent=1 // pred_check_branch
      %10 = sbr.rel (0) target = $region5
    $region4: #{tpu_custom_call.1} parent=1 // pred_region
      _
    $region5: #{tpu_custom_call.1} parent=1 // pred_fallthru
      _
    // Predicated region
    $region6: #{tpu_custom_call.1} parent=1 // pred_check
      _
    $region7: #{tpu_custom_call.1} parent=1 // pred_check_branch
      %12 = sbr.rel (0) target = $region9
    $region8: #{tpu_custom_call.1} parent=1 // pred_region
      _
    $region9: #{tpu_custom_call.1} parent=1 // pred_fallthru
      _
    // Predicated region
    $region10: #{tpu_custom_call.1} parent=1 // pred_check
      _
    $region11: #{tpu_custom_call.1} parent=1 // pred_check_branch
      %14 = sbr.rel (0) target = $region13
    $region12: #{tpu_custom_call.1} parent=1 // pred_region
      _
    $region13: #{tpu_custom_call.1} parent=1 // pred_fallthru
      _
    %p15 = scmp.eq.s32.totalorder 0, 0
    // Predicated region
    $region14: #{tpu_custom_call.1} parent=1 // pred_check
      %p16 = pneg %p15
    $region15: #{tpu_custom_call.1} parent=1 // pred_check_branch
      %18 = sbr.rel (%p16) target = $region17
    $region16: #{tpu_custom_call.1} parent=1 // pred_region
      %19 = vst [vmem:[#allocation2] sm:$0xff] 0.0
      %20 = vst [vmem:[#allocation2 + $0x8] sm:$0xff] 0.0
      %21 = vst [vmem:[#allocation2 + $0x10] sm:$0xff] 0.0
      %22 = vst [vmem:[#allocation2 + $0x18] sm:$0xff] 0.0
    $region17: #{tpu_custom_call.1} parent=1 // pred_fallthru
      _
    %v23 = vld [vmem:[%s0] sm:$0xff]
    %v24 = vld [vmem:[%s0 + $0x8] sm:$0xff]
    %v25 = vld [vmem:[%s1] sm:$0xff]
    %v26 = vld [vmem:[%s1 + $0x8] sm:$0xff]
    %v27 = vld [vmem:[%s1 + $0x10] sm:$0xff]
    %v28 = vld [vmem:[%s1 + $0x18] sm:$0xff]
    %v29 = vld [vmem:[%s1 + $0x20] sm:$0xff]
    %v30 = vld [vmem:[%s1 + $0x28] sm:$0xff]
    %v31 = vld [vmem:[%s1 + $0x30] sm:$0xff]
    %v32 = vld [vmem:[%s1 + $0x38] sm:$0xff]
    %v33 = vld [vmem:[%s1 + $0x40] sm:$0xff]
    %v34 = vld [vmem:[%s1 + $0x48] sm:$0xff]
    %v35 = vld [vmem:[%s1 + $0x50] sm:$0xff]
    %v36 = vld [vmem:[%s1 + $0x58] sm:$0xff]
    %v37 = vld [vmem:[%s1 + $0x60] sm:$0xff]
    %v38 = vld [vmem:[%s1 + $0x68] sm:$0xff]
    %v39 = vld [vmem:[%s1 + $0x70] sm:$0xff]
    %v40 = vld [vmem:[%s1 + $0x78] sm:$0xff]
    %v41 = vld [vmem:[%s1 + $0x80] sm:$0xff]
    %v42 = vld [vmem:[%s1 + $0x88] sm:$0xff]
    %v43 = vld [vmem:[%s1 + $0x90] sm:$0xff]
    %v44 = vld [vmem:[%s1 + $0x98] sm:$0xff]
    %v45 = vld [vmem:[%s1 + $0xa0] sm:$0xff]
    %v46 = vld [vmem:[%s1 + $0xa8] sm:$0xff]
    %v47 = vld [vmem:[%s1 + $0xb0] sm:$0xff]
    %v48 = vld [vmem:[%s1 + $0xb8] sm:$0xff]
    %v49 = vld [vmem:[%s1 + $0xc0] sm:$0xff]
    %v50 = vld [vmem:[%s1 + $0xc8] sm:$0xff]
    %v51 = vld [vmem:[%s1 + $0xd0] sm:$0xff]
    %v52 = vld [vmem:[%s1 + $0xd8] sm:$0xff]
    %v53 = vld [vmem:[%s1 + $0xe0] sm:$0xff]
    %v54 = vld [vmem:[%s1 + $0xe8] sm:$0xff]
    %v55 = vld [vmem:[%s1 + $0xf0] sm:$0xff]
    %v56 = vld [vmem:[%s1 + $0xf8] sm:$0xff]
    %v57 = vld [vmem:[#allocation2] sm:$0xff]
    %v58 = vld [vmem:[#allocation2 + $0x8] sm:$0xff]
    %v59 = vld [vmem:[#allocation2 + $0x10] sm:$0xff]
    %v60 = vld [vmem:[#allocation2 + $0x18] sm:$0xff]
    %vm61 = vcmask 261120
    %v63 = vsel %vm61, %v23, 0
    %v66 = vsel %vm61, %v24, 0
    %v69 = vsel %vm61, %v25, 0
    %v72 = vsel %vm61, %v26, 0
    %v75 = vsel %vm61, %v27, 0
    %v78 = vsel %vm61, %v28, 0
    %v81 = vsel %vm61, %v29, 0
    %v84 = vsel %vm61, %v30, 0
    %v87 = vsel %vm61, %v31, 0
    %v90 = vsel %vm61, %v32, 0
    %v93 = vsel %vm61, %v33, 0
    %v96 = vsel %vm61, %v34, 0
    %v99 = vsel %vm61, %v35, 0
    %v102 = vsel %vm61, %v36, 0
    %v105 = vsel %vm61, %v37, 0
    %v108 = vsel %vm61, %v38, 0
    %v111 = vsel %vm61, %v39, 0
    %v114 = vsel %vm61, %v40, 0
    %v117 = vsel %vm61, %v41, 0
    %v120 = vsel %vm61, %v42, 0
    %v123 = vsel %vm61, %v43, 0
    %v126 = vsel %vm61, %v44, 0
    %v129 = vsel %vm61, %v45, 0
    %v132 = vsel %vm61, %v46, 0
    %v135 = vsel %vm61, %v47, 0
    %v138 = vsel %vm61, %v48, 0
    %v141 = vsel %vm61, %v49, 0
    %v144 = vsel %vm61, %v50, 0
    %v147 = vsel %vm61, %v51, 0
    %v150 = vsel %vm61, %v52, 0
    %v153 = vsel %vm61, %v53, 0
    %v156 = vsel %vm61, %v54, 0
    %v159 = vsel %vm61, %v55, 0
    %v162 = vsel %vm61, %v56, 0
    %164 = vmatprep.subr.mxu0 0.0
    %165 = vmatpush1.xpose.msra.mxu0 %v69
    %166 = vmatprep.subr.mxu0 0.0
    %167 = vmatpush1.xpose.msra.mxu0 %v72
    %168 = vmatprep.subr.mxu0 0.0
    %169 = vmatpush1.xpose.msra.mxu0 %v75
    %170 = vmatprep.subr.mxu0 0.0
    %171 = vmatpush1.xpose.msra.mxu0 %v78
    %172 = vmatprep.subr.mxu0 0.0
    %173 = vmatpush1.xpose.msra.mxu0 %v81
    %174 = vmatprep.subr.mxu0 0.0
    %175 = vmatpush1.xpose.msra.mxu0 %v84
    %176 = vmatprep.subr.mxu0 0.0
    %177 = vmatpush1.xpose.msra.mxu0 %v87
    %178 = vmatprep.subr.mxu0 0.0
    %179 = vmatpush1.xpose.msra.mxu0 %v90
    %180 = vmatprep.subr.mxu0 0.0
    %181 = vmatpush1.xpose.msra.mxu0 %v93
    %182 = vmatprep.subr.mxu0 0.0
    %183 = vmatpush1.xpose.msra.mxu0 %v96
    %184 = vmatprep.subr.mxu0 0.0
    %185 = vmatpush1.xpose.msra.mxu0 %v99
    %186 = vmatprep.subr.mxu0 0.0
    %187 = vmatpush1.xpose.msra.mxu0 %v102
    %188 = vmatprep.subr.mxu0 0.0
    %189 = vmatpush1.xpose.msra.mxu0 %v105
    %190 = vmatprep.subr.mxu0 0.0
    %191 = vmatpush1.xpose.msra.mxu0 %v108
    %192 = vmatprep.subr.mxu0 0.0
    %193 = vmatpush1.xpose.msra.mxu0 %v111
    %194 = vmatprep.subr.mxu0 0.0
    %195 = vmatpush1.xpose.msra.mxu0 %v114
    %196 = vmatprep.subr.mxu0 0.0
    %197 = vmatpush1.xpose.msra.mxu0 %v117
    %198 = vmatprep.subr.mxu0 0.0
    %199 = vmatpush1.xpose.msra.mxu0 %v120
    %200 = vmatprep.subr.mxu0 0.0
    %201 = vmatpush1.xpose.msra.mxu0 %v123
    %202 = vmatprep.subr.mxu0 0.0
    %203 = vmatpush1.xpose.msra.mxu0 %v126
    %204 = vmatprep.subr.mxu0 0.0
    %205 = vmatpush1.xpose.msra.mxu0 %v129
    %206 = vmatprep.subr.mxu0 0.0
    %207 = vmatpush1.xpose.msra.mxu0 %v132
    %208 = vmatprep.subr.mxu0 0.0
    %209 = vmatpush1.xpose.msra.mxu0 %v135
    %210 = vmatprep.subr.mxu0 0.0
    %211 = vmatpush1.xpose.msra.mxu0 %v138
    %212 = vmatprep.subr.mxu0 0.0
    %213 = vmatpush1.xpose.msra.mxu0 %v141
    %214 = vmatprep.subr.mxu0 0.0
    %215 = vmatpush1.xpose.msra.mxu0 %v144
    %216 = vmatprep.subr.mxu0 0.0
    %217 = vmatpush1.xpose.msra.mxu0 %v147
    %218 = vmatprep.subr.mxu0 0.0
    %219 = vmatpush1.xpose.msra.mxu0 %v150
    %220 = vmatprep.subr.mxu0 0.0
    %221 = vmatpush1.xpose.msra.mxu0 %v153
    %222 = vmatprep.subr.mxu0 0.0
    %223 = vmatpush1.xpose.msra.mxu0 %v156
    %224 = vmatprep.subr.mxu0 0.0
    %225 = vmatpush1.xpose.msra.mxu0 %v159
    %226 = vmatprep.subr.mxu0 0.0
    %227 = vmatpush1.xpose.msra.mxu0 %v162
    %228 = vmatprep.mubr.f32.mxu0 0.0
    %229 = vmatmul.mubr.f32.gmra.mrb[0].mxu0 %v63
    %v230 = vpop.f32.mrb[0].mxu0
    %v231 = vadd.f32 0.0, %v230
    %v232 = vpop.f32.mrb[0].mxu0
    %v233 = vadd.f32 0.0, %v232
    %234 = vmatprep.mubr.f32.mxu0 0.0
    %235 = vmatmul.mubr.f32.gmra.mrb[0].mxu0 %v66
    %v236 = vpop.f32.mrb[0].mxu0
    %v237 = vadd.f32 0.0, %v236
    %v238 = vpop.f32.mrb[0].mxu0
    %v239 = vadd.f32 0.0, %v238
    %240 = vdwg.mxu0
    %v241 = vadd.f32 %v57, %v231
    %v242 = vadd.f32 %v58, %v233
    %v243 = vadd.f32 %v59, %v237
    %v244 = vadd.f32 %v60, %v239
    %245 = vst [vmem:[#allocation2] sm:$0xff] %v241
    %246 = vst [vmem:[#allocation2 + $0x8] sm:$0xff] %v242
    %247 = vst [vmem:[#allocation2 + $0x10] sm:$0xff] %v243
    %248 = vst [vmem:[#allocation2 + $0x18] sm:$0xff] %v244
    // Predicated region
    $region18: #{tpu_custom_call.1} parent=1 // pred_check
      %p249 = pneg %p15
    $region19: #{tpu_custom_call.1} parent=1 // pred_check_branch
      %251 = sbr.rel (%p249) target = $region21
    $region20: #{tpu_custom_call.1} parent=1 // pred_region
      %v252 = vld [vmem:[#allocation2] sm:$0xff]
      %v253 = vld [vmem:[#allocation2 + $0x8] sm:$0xff]
      %v254 = vld [vmem:[#allocation2 + $0x10] sm:$0xff]
      %v255 = vld [vmem:[#allocation2 + $0x18] sm:$0xff]
      %v256 = vld [vmem:[%s2] sm:$0x3]
      %v258 = vlaneseq
      %v259 = vshrl.u32 %v258, 7
      %v260 = vsub.s32 0, %v259
      %v261 = vrot.slane %v256, %v260
      %v262 = vlaneseq
      %v263 = vshrl.u32 %v262, 7
      %v264 = vsub.s32 1, %v263
      %v265 = vrot.slane %v256, %v264
      %v268 = vadd.f32 %v252, %v261
      %v269 = vadd.f32 %v253, %v265
      %v270 = vadd.f32 %v254, %v261
      %v271 = vadd.f32 %v255, %v265
      %272 = vst [vmem:[#allocation3] sm:$0xff] %v268
      %273 = vst [vmem:[#allocation3 + $0x8] sm:$0xff] %v269
      %274 = vst [vmem:[#allocation3 + $0x10] sm:$0xff] %v270
      %275 = vst [vmem:[#allocation3 + $0x18] sm:$0xff] %v271
    $region21: #{tpu_custom_call.1} parent=1 // pred_fallthru
      _
    // Predicated region
    $region22: #{tpu_custom_call.1} parent=1 // pred_check
      _
    $region23: #{tpu_custom_call.1} parent=1 // pred_check_branch
      %277 = sbr.rel (0) target = $region25
    $region24: #{tpu_custom_call.1} parent=1 // pred_region
      %s279 = ssub.s32 512, 512
      %280 = vsyncadd [#allocation4], %s279
      %s281 = sshll.u32 [#allocation3], 4
      %s282 = int_to_ptr.vmem [resolvable:$true] %s281
      %287 = dma.vmem_to_hbm [thread:$0]  %s282, 512, %s3, [#allocation4], 256, 256, 16
    $region25: #{tpu_custom_call.1} parent=1 // pred_fallthru
      _
    // Predicated region
    $region26: #{tpu_custom_call.1} parent=1 // pred_check
      _
    $region27: #{tpu_custom_call.1} parent=1 // pred_check_branch
      %289 = sbr.rel (0) target = $region29
    $region28: #{tpu_custom_call.1} parent=1 // pred_region
      %290 = dma.done [#allocation4], 512
    $region29: #{tpu_custom_call.1} parent=1 // pred_fallthru
      _
    %291 = vsyncpa [#allocation4], 1

</llo_original>
